<compile_context>
chip_gen: v6e
topology: v6e:2x2x1
jax: 0.10.0
libtpu: 0.0.40
codegen_flags: <defaults>
</compile_context>

<pallas_src>
import functools

import jax
import jax.numpy as jnp
from jax import lax
from jax.experimental import pallas as pl
from jax.experimental.pallas import tpu as pltpu


def _feature_kernel(qf_ref, gf_ref, feat_ref):
    # feature = row_normalize((qf - gf)^2); cast to f32 in VMEM.
    diff = qf_ref[...].astype(jnp.float32) - gf_ref[...].astype(jnp.float32)
    d2 = diff * diff                                         # (tm, D)
    rs = jnp.sum(d2, axis=-1, keepdims=True)                 # (tm, 1)
    r_inv = jnp.where(rs == 0.0, 0.0, 1.0 / rs)              # 1/0 -> 0 (matches np.power+isinf)
    feat_ref[...] = d2 * r_inv


def _adj_kernel(feat_ref, adj_ref, *, tm, n_valid):
    ib = pl.program_id(0)
    row0 = pl.multiple_of(ib * tm, tm)

    feat_all = feat_ref[...]                                 # (Np, D) f32, resident
    feat_blk = feat_ref[pl.ds(row0, tm), :]                  # (tm, D)

    # Pairwise squared distances of this row block against all rows:
    #   dist[i,j] = |f_i|^2 + |f_j|^2 - 2 <f_i, f_j>
    # Gram matrix on the MXU, contracting on D -- feat.T is never materialized.
    gram = lax.dot_general(
        feat_blk, feat_all,
        dimension_numbers=(((1,), (1,)), ((), ())),
        preferred_element_type=jnp.float32)                  # (tm, Np)
    sq_blk = jnp.sum(feat_blk * feat_blk, axis=-1, keepdims=True)      # (tm, 1)
    sq_all = jnp.sum(feat_all * feat_all, axis=-1, keepdims=True).T    # (1, Np)
    # dist is symmetric by construction, so the reference's max(adj, adj.T) is a
    # no-op; clamp at 0 instead to kill tiny negative cancellation error.
    dist = jnp.maximum(sq_blk + sq_all - 2.0 * gram, 0.0)    # (tm, Np)

    # adj + I (only this slab's diagonal) and mask padded columns out.
    rows = row0 + lax.broadcasted_iota(jnp.int32, dist.shape, 0)
    cols = lax.broadcasted_iota(jnp.int32, dist.shape, 1)
    adj = dist + (rows == cols).astype(jnp.float32)
    adj = jnp.where(cols < n_valid, adj, 0.0)

    # row_normalize(adj + I)
    rs = jnp.sum(adj, axis=-1, keepdims=True)
    r_inv = jnp.where(rs == 0.0, 0.0, 1.0 / rs)
    adj_ref[...] = adj * r_inv


def sggnn_prepare_test(qf, gf):
    """qf, gf: (N, D) float arrays (any float dtype).

    Returns (adj (N, N) f32, feature (N, D) f32)."""
    n, d = qf.shape
    # Pad rows to a multiple of 128: lane-dense adj tiles and arbitrary N.
    n_pad = int(pl.cdiv(n, 128)) * 128
    if n_pad != n:
        pad = ((0, n_pad - n), (0, 0))
        qf = jnp.pad(qf, pad)
        gf = jnp.pad(gf, pad)

    # Row-block size: 256-aligned fills the 256x256 MXU on v6e/v7x; 128 otherwise
    # (also the right granule for v5e's 128x128 MXUs).
    tm = 256 if n_pad % 256 == 0 else 128
    # TODO(synk): for very large N (>~4K rows) retile adj over columns as well so
    # the (tm, Np) slab plus the resident feature matrix fit v7x's 64 MiB VMEM.

    grid = (n_pad // tm,)

    feat = pl.pallas_call(
        _feature_kernel,
        grid=grid,
        in_specs=[
            pl.BlockSpec((tm, d), lambda i: (i, 0)),
            pl.BlockSpec((tm, d), lambda i: (i, 0)),
        ],
        out_specs=pl.BlockSpec((tm, d), lambda i: (i, 0)),
        out_shape=jax.ShapeDtypeStruct((n_pad, d), jnp.float32),
        compiler_params=pltpu.CompilerParams(
            dimension_semantics=("parallel",),
            vmem_limit_bytes=32 * 1024 * 1024),
    )(qf, gf)

    adj = pl.pallas_call(
        functools.partial(_adj_kernel, tm=tm, n_valid=n),
        grid=grid,
        in_specs=[
            # Full feature matrix; block index is constant so it is fetched once
            # and stays resident across the row-slab grid.
            pl.BlockSpec((n_pad, d), lambda i: (0, 0)),
        ],
        out_specs=pl.BlockSpec((tm, n_pad), lambda i: (i, 0)),
        out_shape=jax.ShapeDtypeStruct((n_pad, n_pad), jnp.float32),
        compiler_params=pltpu.CompilerParams(
            dimension_semantics=("parallel",),
            vmem_limit_bytes=32 * 1024 * 1024),
    )(feat)

    return adj[:n, :n], feat[:n]


def _reference(qf, gf):
    """Pure-JAX reference mirroring the PyTorch/numpy code path."""
    qf = qf.astype(jnp.float32)
    gf = gf.astype(jnp.float32)
    feat = (qf - gf) ** 2
    rs = jnp.sum(feat, axis=1, keepdims=True)
    r_inv = jnp.where(rs == 0.0, 0.0, 1.0 / rs)
    feat = feat * r_inv
    diff = feat[:, None, :] - feat[None, :, :]
    adj = jnp.sum(diff * diff, axis=-1)
    gt = adj.T > adj
    adj = adj + adj.T * gt - adj * gt
    adj = adj + jnp.eye(adj.shape[0], dtype=jnp.float32)
    rs2 = jnp.sum(adj, axis=1, keepdims=True)
    r2 = jnp.where(rs2 == 0.0, 0.0, 1.0 / rs2)
    return adj * r2, feat


if __name__ == "__main__":
    N, D = 8, 512  # len_feature = 512 as in the module; small batch
    key = jax.random.PRNGKey(0)
    kq, kg = jax.random.split(key)
    qf = jax.random.normal(kq, (N, D), dtype=jnp.float32)
    gf = jax.random.normal(kg, (N, D), dtype=jnp.float32)

    adj, feat = sggnn_prepare_test(qf, gf)
    adj, feat = jax.block_until_ready((adj, feat))

    adj_ref, feat_ref = _reference(qf, gf)
    assert adj.shape == (N, N) and feat.shape == (N, D)
    assert jnp.allclose(feat, feat_ref, atol=1e-5, rtol=1e-5)
    assert jnp.allclose(adj, adj_ref, atol=1e-5, rtol=1e-5)

    print("KERNEL_OK")
</pallas_src>

<mosaic_0001>
module attributes {stable_mosaic.version = 11 : i64} {
  func.func @_feature_kernel(%arg0: i32, %arg1: memref<128x512xf32, #tpu.memory_space<vmem>>, %arg2: memref<128x512xf32, #tpu.memory_space<vmem>>, %arg3: memref<128x512xf32, #tpu.memory_space<vmem>>) attributes {dimension_semantics = [#tpu.dimension_semantics<parallel>], iteration_bounds = array<i64: 1>, scalar_prefetch = 0 : i64, scratch_operands = 0 : i64, tpu.core_type = #tpu.core_type<tc>, window_params = [{transform_indices = @transform_0, window_bounds = array<i64: 128, 512>}, {transform_indices = @transform_1, window_bounds = array<i64: 128, 512>}, {transform_indices = @transform_2, window_bounds = array<i64: 128, 512>}]} {
    %c0 = arith.constant 0 : index
    %c0_0 = arith.constant 0 : index
    %0 = vector.load %arg1[%c0, %c0_0] : memref<128x512xf32, #tpu.memory_space<vmem>>, vector<128x512xf32>
    %c0_1 = arith.constant 0 : index
    %c0_2 = arith.constant 0 : index
    %1 = vector.load %arg2[%c0_1, %c0_2] : memref<128x512xf32, #tpu.memory_space<vmem>>, vector<128x512xf32>
    %2 = arith.subf %0, %1 : vector<128x512xf32>
    %3 = arith.mulf %2, %2 : vector<128x512xf32>
    %cst = arith.constant dense<0.000000e+00> : vector<128xf32>
    %4 = vector.multi_reduction <add>, %3, %cst [1] : vector<128x512xf32> to vector<128xf32>
    %5 = vector.shape_cast %4 : vector<128xf32> to vector<128x1xf32>
    %cst_3 = arith.constant 0.000000e+00 : f32
    %6 = vector.broadcast %cst_3 : f32 to vector<128x1xf32>
    %7 = arith.cmpf oeq, %5, %6 : vector<128x1xf32>
    %cst_4 = arith.constant 1.000000e+00 : f32
    %8 = vector.broadcast %cst_4 : f32 to vector<128x1xf32>
    %9 = arith.divf %8, %5 : vector<128x1xf32>
    %cst_5 = arith.constant 0.000000e+00 : f32
    %10 = vector.broadcast %cst_5 : f32 to vector<128x1xf32>
    %11 = arith.select %7, %10, %9 : vector<128x1xi1>, vector<128x1xf32>
    %12 = vector.broadcast %11 : vector<128x1xf32> to vector<128x512xf32>
    %13 = arith.mulf %3, %12 : vector<128x512xf32>
    %c0_6 = arith.constant 0 : index
    %c0_7 = arith.constant 0 : index
    %14 = vector.load %arg3[%c0_6, %c0_7] : memref<128x512xf32, #tpu.memory_space<vmem>>, vector<128x512xf32>
    tpu.vector_store %arg3[%c0_6, %c0_7], %13 {strides = array<i32>} : memref<128x512xf32, #tpu.memory_space<vmem>>, vector<128x512xf32>,
    return
  }
  func.func @transform_0(%arg0: i32) -> (i32, i32) {
    %c0_i32 = arith.constant 0 : i32
    %c0_i32_0 = arith.constant 0 : i32
    return %arg0, %c0_i32 : i32, i32
  }
  func.func @transform_1(%arg0: i32) -> (i32, i32) {
    %c0_i32 = arith.constant 0 : i32
    %c0_i32_0 = arith.constant 0 : i32
    return %arg0, %c0_i32 : i32, i32
  }
  func.func @transform_2(%arg0: i32) -> (i32, i32) {
    %c0_i32 = arith.constant 0 : i32
    %c0_i32_0 = arith.constant 0 : i32
    return %arg0, %c0_i32 : i32, i32
  }
}

</mosaic_0001>

<llo_original>
// kernel: tpu_custom_call.1
$region0: #{tpu_custom_call.1}
  #allocation0 [shape = 'u32[]', space=smem, size = 0x4, offset = 0x4, fixed_abs, tag = 'smem constant byte address 0x4 - core index']
  #allocation1 [shape = 'u32[144,128]{1,0:T(1,128)}', space=vmem, size = 0x12000, scoped, tag = 'internal scratch']
  %s0 = inlined_call_operand.hbm [shape: f32[128,512], index: 0, kind: input, shape index: {}]
  %s1 = inlined_call_operand.hbm [shape: f32[128,512], index: 1, kind: input, shape index: {}]
  %s2 = inlined_call_operand.hbm [shape: f32[128,512], index: 2, kind: output, shape index: {}]
  %s3 = sld [smem:[#allocation0]]
  $region26: #{tpu_custom_call.1} parent=0
    _
  %s5 = ssub.s32 1, %s3
  %s6 = scalar_select 0, %s5, %s3
  $region1: #{tpu_custom_call.1} parent=0
    #allocation2 [shape = 'u8[262144]{0}', space=vmem, size = 0x40000, scoped, tag = 'input window, operand 0, single buffered']
    #allocation3 [shape = 's32[1]{0}', space=sflag, size = 0x4, scoped, tag = 'scoped memory for tpu_custom_call.1']
    #allocation4 [shape = 's32[1]{0}', space=sflag, size = 0x4, scoped, tag = 'scoped memory for tpu_custom_call.1']
    #allocation5 [shape = 'u8[262144]{0}', space=vmem, size = 0x40000, scoped, tag = 'input window, operand 1, single buffered']
    #allocation6 [shape = 's32[1]{0}', space=sflag, size = 0x4, scoped, tag = 'scoped memory for tpu_custom_call.1']
    #allocation7 [shape = 'u8[262144]{0}', space=vmem, size = 0x40000, scoped, tag = 'output window, operand 0, single buffered']
    %7 = vsyncpa [#allocation3], 0
    %8 = vsyncpa [#allocation6], 0
    %9 = vsyncpa [#allocation4], 0
    // Predicated region
    $region2: #{tpu_custom_call.1} parent=1 // pred_check
      _
    $region3: #{tpu_custom_call.1} parent=1 // pred_check_branch
      %11 = sbr.rel (0) target = $region5
    $region4: #{tpu_custom_call.1} parent=1 // pred_region
      %s13 = ssub.s32 8192, 8192
      %14 = vsyncadd [#allocation3], %s13
      %s15 = sshll.u32 [#allocation2], 4
      %s16 = int_to_ptr.vmem [resolvable:$true] %s15
      %21 = dma.hbm_to_vmem [thread:$0]  %s0, 8192, %s16, [#allocation3], 512, 512, 32
    $region5: #{tpu_custom_call.1} parent=1 // pred_fallthru
      _
    // Predicated region
    $region6: #{tpu_custom_call.1} parent=1 // pred_check
      _
    $region7: #{tpu_custom_call.1} parent=1 // pred_check_branch
      %23 = sbr.rel (0) target = $region9
    $region8: #{tpu_custom_call.1} parent=1 // pred_region
      %s25 = ssub.s32 8192, 8192
      %26 = vsyncadd [#allocation6], %s25
      %s27 = sshll.u32 [#allocation5], 4
      %s28 = int_to_ptr.vmem [resolvable:$true] %s27
      %33 = dma.hbm_to_vmem [thread:$0]  %s1, 8192, %s28, [#allocation6], 512, 512, 32
    $region9: #{tpu_custom_call.1} parent=1 // pred_fallthru
      _
    // Predicated region
    $region10: #{tpu_custom_call.1} parent=1 // pred_check
      _
    $region11: #{tpu_custom_call.1} parent=1 // pred_check_branch
      %35 = sbr.rel (0) target = $region13
    $region12: #{tpu_custom_call.1} parent=1 // pred_region
      %36 = dma.done [#allocation3], 8192
    $region13: #{tpu_custom_call.1} parent=1 // pred_fallthru
      _
    // Predicated region
    $region14: #{tpu_custom_call.1} parent=1 // pred_check
      _
    $region15: #{tpu_custom_call.1} parent=1 // pred_check_branch
      %38 = sbr.rel (0) target = $region17
    $region16: #{tpu_custom_call.1} parent=1 // pred_region
      %39 = dma.done [#allocation6], 8192
    $region17: #{tpu_custom_call.1} parent=1 // pred_fallthru
      _
    %v40 = vld [vmem:[#allocation2] sm:$0xff]
    %v41 = vld [vmem:[#allocation2 + $0x8] sm:$0xff]
    %v42 = vld [vmem:[#allocation2 + $0x10] sm:$0xff]
    %v43 = vld [vmem:[#allocation2 + $0x18] sm:$0xff]
    %v44 = vld [vmem:[#allocation2 + $0x20] sm:$0xff]
    %v45 = vld [vmem:[#allocation2 + $0x28] sm:$0xff]
    %v46 = vld [vmem:[#allocation2 + $0x30] sm:$0xff]
    %v47 = vld [vmem:[#allocation2 + $0x38] sm:$0xff]
    %v48 = vld [vmem:[#allocation2 + $0x40] sm:$0xff]
    %v49 = vld [vmem:[#allocation2 + $0x48] sm:$0xff]
    %v50 = vld [vmem:[#allocation2 + $0x50] sm:$0xff]
    %v51 = vld [vmem:[#allocation2 + $0x58] sm:$0xff]
    %v52 = vld [vmem:[#allocation2 + $0x60] sm:$0xff]
    %v53 = vld [vmem:[#allocation2 + $0x68] sm:$0xff]
    %v54 = vld [vmem:[#allocation2 + $0x70] sm:$0xff]
    %v55 = vld [vmem:[#allocation2 + $0x78] sm:$0xff]
    %v56 = vld [vmem:[#allocation2 + $0x80] sm:$0xff]
    %v57 = vld [vmem:[#allocation2 + $0x88] sm:$0xff]
    %v58 = vld [vmem:[#allocation2 + $0x90] sm:$0xff]
    %v59 = vld [vmem:[#allocation2 + $0x98] sm:$0xff]
    %v60 = vld [vmem:[#allocation2 + $0xa0] sm:$0xff]
    %v61 = vld [vmem:[#allocation2 + $0xa8] sm:$0xff]
    %v62 = vld [vmem:[#allocation2 + $0xb0] sm:$0xff]
    %v63 = vld [vmem:[#allocation2 + $0xb8] sm:$0xff]
    %v64 = vld [vmem:[#allocation2 + $0xc0] sm:$0xff]
    %v65 = vld [vmem:[#allocation2 + $0xc8] sm:$0xff]
    %v66 = vld [vmem:[#allocation2 + $0xd0] sm:$0xff]
    %v67 = vld [vmem:[#allocation2 + $0xd8] sm:$0xff]
    %v68 = vld [vmem:[#allocation2 + $0xe0] sm:$0xff]
    %v69 = vld [vmem:[#allocation2 + $0xe8] sm:$0xff]
    %v70 = vld [vmem:[#allocation2 + $0xf0] sm:$0xff]
    %v71 = vld [vmem:[#allocation2 + $0xf8] sm:$0xff]
    %v72 = vld [vmem:[#allocation2 + $0x100] sm:$0xff]
    %v73 = vld [vmem:[#allocation2 + $0x108] sm:$0xff]
    %v74 = vld [vmem:[#allocation2 + $0x110] sm:$0xff]
    %v75 = vld [vmem:[#allocation2 + $0x118] sm:$0xff]
    %v76 = vld [vmem:[#allocation2 + $0x120] sm:$0xff]
    %v77 = vld [vmem:[#allocation2 + $0x128] sm:$0xff]
    %v78 = vld [vmem:[#allocation2 + $0x130] sm:$0xff]
    %v79 = vld [vmem:[#allocation2 + $0x138] sm:$0xff]
    %v80 = vld [vmem:[#allocation2 + $0x140] sm:$0xff]
    %v81 = vld [vmem:[#allocation2 + $0x148] sm:$0xff]
    %v82 = vld [vmem:[#allocation2 + $0x150] sm:$0xff]
    %v83 = vld [vmem:[#allocation2 + $0x158] sm:$0xff]
    %v84 = vld [vmem:[#allocation2 + $0x160] sm:$0xff]
    %v85 = vld [vmem:[#allocation2 + $0x168] sm:$0xff]
    %v86 = vld [vmem:[#allocation2 + $0x170] sm:$0xff]
    %v87 = vld [vmem:[#allocation2 + $0x178] sm:$0xff]
    %v88 = vld [vmem:[#allocation2 + $0x180] sm:$0xff]
    %v89 = vld [vmem:[#allocation2 + $0x188] sm:$0xff]
    %v90 = vld [vmem:[#allocation2 + $0x190] sm:$0xff]
    %v91 = vld [vmem:[#allocation2 + $0x198] sm:$0xff]
    %v92 = vld [vmem:[#allocation2 + $0x1a0] sm:$0xff]
    %v93 = vld [vmem:[#allocation2 + $0x1a8] sm:$0xff]
    %v94 = vld [vmem:[#allocation2 + $0x1b0] sm:$0xff]
    %v95 = vld [vmem:[#allocation2 + $0x1b8] sm:$0xff]
    %v96 = vld [vmem:[#allocation2 + $0x1c0] sm:$0xff]
    %v97 = vld [vmem:[#allocation2 + $0x1c8] sm:$0xff]
    %v98 = vld [vmem:[#allocation2 + $0x1d0] sm:$0xff]
    %v99 = vld [vmem:[#allocation2 + $0x1d8] sm:$0xff]
    %v100 = vld [vmem:[#allocation2 + $0x1e0] sm:$0xff]
    %v101 = vld [vmem:[#allocation2 + $0x1e8] sm:$0xff]
    %v102 = vld [vmem:[#allocation2 + $0x1f0] sm:$0xff]
    %v103 = vld [vmem:[#allocation2 + $0x1f8] sm:$0xff]
    %v104 = vld [vmem:[#allocation5] sm:$0xff]
    %v105 = vld [vmem:[#allocation5 + $0x8] sm:$0xff]
    %v106 = vld [vmem:[#allocation5 + $0x10] sm:$0xff]
    %v107 = vld [vmem:[#allocation5 + $0x18] sm:$0xff]
    %v108 = vld [vmem:[#allocation5 + $0x20] sm:$0xff]
    %v109 = vld [vmem:[#allocation5 + $0x28] sm:$0xff]
    %v110 = vld [vmem:[#allocation5 + $0x30] sm:$0xff]
    %v111 = vld [vmem:[#allocation5 + $0x38] sm:$0xff]
    %v112 = vld [vmem:[#allocation5 + $0x40] sm:$0xff]
    %v113 = vld [vmem:[#allocation5 + $0x48] sm:$0xff]
    %v114 = vld [vmem:[#allocation5 + $0x50] sm:$0xff]
    %v115 = vld [vmem:[#allocation5 + $0x58] sm:$0xff]
    %v116 = vld [vmem:[#allocation5 + $0x60] sm:$0xff]
    %v117 = vld [vmem:[#allocation5 + $0x68] sm:$0xff]
    %v118 = vld [vmem:[#allocation5 + $0x70] sm:$0xff]
    %v119 = vld [vmem:[#allocation5 + $0x78] sm:$0xff]
    %v120 = vld [vmem:[#allocation5 + $0x80] sm:$0xff]
    %v121 = vld [vmem:[#allocation5 + $0x88] sm:$0xff]
    %v122 = vld [vmem:[#allocation5 + $0x90] sm:$0xff]
    %v123 = vld [vmem:[#allocation5 + $0x98] sm:$0xff]
    %v124 = vld [vmem:[#allocation5 + $0xa0] sm:$0xff]
    %v125 = vld [vmem:[#allocation5 + $0xa8] sm:$0xff]
    %v126 = vld [vmem:[#allocation5 + $0xb0] sm:$0xff]
    %v127 = vld [vmem:[#allocation5 + $0xb8] sm:$0xff]
    %v128 = vld [vmem:[#allocation5 + $0xc0] sm:$0xff]
    %v129 = vld [vmem:[#allocation5 + $0xc8] sm:$0xff]
    %v130 = vld [vmem:[#allocation5 + $0xd0] sm:$0xff]
    %v131 = vld [vmem:[#allocation5 + $0xd8] sm:$0xff]
    %v132 = vld [vmem:[#allocation5 + $0xe0] sm:$0xff]
    %v133 = vld [vmem:[#allocation5 + $0xe8] sm:$0xff]
    %v134 = vld [vmem:[#allocation5 + $0xf0] sm:$0xff]
    %v135 = vld [vmem:[#allocation5 + $0xf8] sm:$0xff]
    %v136 = vld [vmem:[#allocation5 + $0x100] sm:$0xff]
    %v137 = vld [vmem:[#allocation5 + $0x108] sm:$0xff]
    %v138 = vld [vmem:[#allocation5 + $0x110] sm:$0xff]
    %v139 = vld [vmem:[#allocation5 + $0x118] sm:$0xff]
    %v140 = vld [vmem:[#allocation5 + $0x120] sm:$0xff]
    %v141 = vld [vmem:[#allocation5 + $0x128] sm:$0xff]
    %v142 = vld [vmem:[#allocation5 + $0x130] sm:$0xff]
    %v143 = vld [vmem:[#allocation5 + $0x138] sm:$0xff]
    %v144 = vld [vmem:[#allocation5 + $0x140] sm:$0xff]
    %v145 = vld [vmem:[#allocation5 + $0x148] sm:$0xff]
    %v146 = vld [vmem:[#allocation5 + $0x150] sm:$0xff]
    %v147 = vld [vmem:[#allocation5 + $0x158] sm:$0xff]
    %v148 = vld [vmem:[#allocation5 + $0x160] sm:$0xff]
    %v149 = vld [vmem:[#allocation5 + $0x168] sm:$0xff]
    %v150 = vld [vmem:[#allocation5 + $0x170] sm:$0xff]
    %v151 = vld [vmem:[#allocation5 + $0x178] sm:$0xff]
    %v152 = vld [vmem:[#allocation5 + $0x180] sm:$0xff]
    %v153 = vld [vmem:[#allocation5 + $0x188] sm:$0xff]
    %v154 = vld [vmem:[#allocation5 + $0x190] sm:$0xff]
    %v155 = vld [vmem:[#allocation5 + $0x198] sm:$0xff]
    %v156 = vld [vmem:[#allocation5 + $0x1a0] sm:$0xff]
    %v157 = vld [vmem:[#allocation5 + $0x1a8] sm:$0xff]
    %v158 = vld [vmem:[#allocation5 + $0x1b0] sm:$0xff]
    %v159 = vld [vmem:[#allocation5 + $0x1b8] sm:$0xff]
    %v160 = vld [vmem:[#allocation5 + $0x1c0] sm:$0xff]
    %v161 = vld [vmem:[#allocation5 + $0x1c8] sm:$0xff]
    %v162 = vld [vmem:[#allocation5 + $0x1d0] sm:$0xff]
    %v163 = vld [vmem:[#allocation5 + $0x1d8] sm:$0xff]
    %v164 = vld [vmem:[#allocation5 + $0x1e0] sm:$0xff]
    %v165 = vld [vmem:[#allocation5 + $0x1e8] sm:$0xff]
    %v166 = vld [vmem:[#allocation5 + $0x1f0] sm:$0xff]
    %v167 = vld [vmem:[#allocation5 + $0x1f8] sm:$0xff]
    %v168 = vsub.f32 %v40, %v104
    %v169 = vsub.f32 %v41, %v105
    %v170 = vsub.f32 %v42, %v106
    %v171 = vsub.f32 %v43, %v107
    %v172 = vsub.f32 %v44, %v108
    %v173 = vsub.f32 %v45, %v109
    %v174 = vsub.f32 %v46, %v110
    %v175 = vsub.f32 %v47, %v111
    %v176 = vsub.f32 %v48, %v112
    %v177 = vsub.f32 %v49, %v113
    %v178 = vsub.f32 %v50, %v114
    %v179 = vsub.f32 %v51, %v115
    %v180 = vsub.f32 %v52, %v116
    %v181 = vsub.f32 %v53, %v117
    %v182 = vsub.f32 %v54, %v118
    %v183 = vsub.f32 %v55, %v119
    %v184 = vsub.f32 %v56, %v120
    %v185 = vsub.f32 %v57, %v121
    %v186 = vsub.f32 %v58, %v122
    %v187 = vsub.f32 %v59, %v123
    %v188 = vsub.f32 %v60, %v124
    %v189 = vsub.f32 %v61, %v125
    %v190 = vsub.f32 %v62, %v126
    %v191 = vsub.f32 %v63, %v127
    %v192 = vsub.f32 %v64, %v128
    %v193 = vsub.f32 %v65, %v129
    %v194 = vsub.f32 %v66, %v130
    %v195 = vsub.f32 %v67, %v131
    %v196 = vsub.f32 %v68, %v132
    %v197 = vsub.f32 %v69, %v133
    %v198 = vsub.f32 %v70, %v134
    %v199 = vsub.f32 %v71, %v135
    %v200 = vsub.f32 %v72, %v136
    %v201 = vsub.f32 %v73, %v137
    %v202 = vsub.f32 %v74, %v138
    %v203 = vsub.f32 %v75, %v139
    %v204 = vsub.f32 %v76, %v140
    %v205 = vsub.f32 %v77, %v141
    %v206 = vsub.f32 %v78, %v142
    %v207 = vsub.f32 %v79, %v143
    %v208 = vsub.f32 %v80, %v144
    %v209 = vsub.f32 %v81, %v145
    %v210 = vsub.f32 %v82, %v146
    %v211 = vsub.f32 %v83, %v147
    %v212 = vsub.f32 %v84, %v148
    %v213 = vsub.f32 %v85, %v149
    %v214 = vsub.f32 %v86, %v150
    %v215 = vsub.f32 %v87, %v151
    %v216 = vsub.f32 %v88, %v152
    %v217 = vsub.f32 %v89, %v153
    %v218 = vsub.f32 %v90, %v154
    %v219 = vsub.f32 %v91, %v155
    %v220 = vsub.f32 %v92, %v156
    %v221 = vsub.f32 %v93, %v157
    %v222 = vsub.f32 %v94, %v158
    %v223 = vsub.f32 %v95, %v159
    %v224 = vsub.f32 %v96, %v160
    %v225 = vsub.f32 %v97, %v161
    %v226 = vsub.f32 %v98, %v162
    %v227 = vsub.f32 %v99, %v163
    %v228 = vsub.f32 %v100, %v164
    %v229 = vsub.f32 %v101, %v165
    %v230 = vsub.f32 %v102, %v166
    %v231 = vsub.f32 %v103, %v167
    %v232 = vmul.f32 %v168, %v168
    %v233 = vmul.f32 %v169, %v169
    %v234 = vmul.f32 %v170, %v170
    %v235 = vmul.f32 %v171, %v171
    %v236 = vmul.f32 %v172, %v172
    %v237 = vmul.f32 %v173, %v173
    %v238 = vmul.f32 %v174, %v174
    %v239 = vmul.f32 %v175, %v175
    %v240 = vmul.f32 %v176, %v176
    %v241 = vmul.f32 %v177, %v177
    %v242 = vmul.f32 %v178, %v178
    %v243 = vmul.f32 %v179, %v179
    %v244 = vmul.f32 %v180, %v180
    %v245 = vmul.f32 %v181, %v181
    %v246 = vmul.f32 %v182, %v182
    %v247 = vmul.f32 %v183, %v183
    %v248 = vmul.f32 %v184, %v184
    %v249 = vmul.f32 %v185, %v185
    %v250 = vmul.f32 %v186, %v186
    %v251 = vmul.f32 %v187, %v187
    %v252 = vmul.f32 %v188, %v188
    %v253 = vmul.f32 %v189, %v189
    %v254 = vmul.f32 %v190, %v190
    %v255 = vmul.f32 %v191, %v191
    %v256 = vmul.f32 %v192, %v192
    %v257 = vmul.f32 %v193, %v193
    %v258 = vmul.f32 %v194, %v194
    %v259 = vmul.f32 %v195, %v195
    %v260 = vmul.f32 %v196, %v196
    %v261 = vmul.f32 %v197, %v197
    %v262 = vmul.f32 %v198, %v198
    %v263 = vmul.f32 %v199, %v199
    %v264 = vmul.f32 %v200, %v200
    %v265 = vmul.f32 %v201, %v201
    %v266 = vmul.f32 %v202, %v202
    %v267 = vmul.f32 %v203, %v203
    %v268 = vmul.f32 %v204, %v204
    %v269 = vmul.f32 %v205, %v205
    %v270 = vmul.f32 %v206, %v206
    %v271 = vmul.f32 %v207, %v207
    %v272 = vmul.f32 %v208, %v208
    %v273 = vmul.f32 %v209, %v209
    %v274 = vmul.f32 %v210, %v210
    %v275 = vmul.f32 %v211, %v211
    %v276 = vmul.f32 %v212, %v212
    %v277 = vmul.f32 %v213, %v213
    %v278 = vmul.f32 %v214, %v214
    %v279 = vmul.f32 %v215, %v215
    %v280 = vmul.f32 %v216, %v216
    %v281 = vmul.f32 %v217, %v217
    %v282 = vmul.f32 %v218, %v218
    %v283 = vmul.f32 %v219, %v219
    %v284 = vmul.f32 %v220, %v220
    %v285 = vmul.f32 %v221, %v221
    %v286 = vmul.f32 %v222, %v222
    %v287 = vmul.f32 %v223, %v223
    %v288 = vmul.f32 %v224, %v224
    %v289 = vmul.f32 %v225, %v225
    %v290 = vmul.f32 %v226, %v226
    %v291 = vmul.f32 %v227, %v227
    %v292 = vmul.f32 %v228, %v228
    %v293 = vmul.f32 %v229, %v229
    %v294 = vmul.f32 %v230, %v230
    %v295 = vmul.f32 %v231, %v231
    %v296 = vadd.f32 %v232, %v233
    %v297 = vadd.f32 %v296, %v234
    %v298 = vadd.f32 %v297, %v235
    %299 = vadd.xlane.f32.xlu0 %v298
    %v300 = vpop.xlane.xlu0 %299
    %v301 = vadd.f32 %v236, %v237
    %v302 = vadd.f32 %v301, %v238
    %v303 = vadd.f32 %v302, %v239
    %304 = vadd.xlane.f32.xlu0 %v303
    %v305 = vpop.xlane.xlu0 %304
    %v306 = vadd.f32 %v240, %v241
    %v307 = vadd.f32 %v306, %v242
    %v308 = vadd.f32 %v307, %v243
    %309 = vadd.xlane.f32.xlu0 %v308
    %v310 = vpop.xlane.xlu0 %309
    %v311 = vadd.f32 %v244, %v245
    %v312 = vadd.f32 %v311, %v246
    %v313 = vadd.f32 %v312, %v247
    %314 = vadd.xlane.f32.xlu0 %v313
    %v315 = vpop.xlane.xlu0 %314
    %v316 = vadd.f32 %v248, %v249
    %v317 = vadd.f32 %v316, %v250
    %v318 = vadd.f32 %v317, %v251
    %319 = vadd.xlane.f32.xlu0 %v318
    %v320 = vpop.xlane.xlu0 %319
    %v321 = vadd.f32 %v252, %v253
    %v322 = vadd.f32 %v321, %v254
    %v323 = vadd.f32 %v322, %v255
    %324 = vadd.xlane.f32.xlu0 %v323
    %v325 = vpop.xlane.xlu0 %324
    %v326 = vadd.f32 %v256, %v257
    %v327 = vadd.f32 %v326, %v258
    %v328 = vadd.f32 %v327, %v259
    %329 = vadd.xlane.f32.xlu0 %v328
    %v330 = vpop.xlane.xlu0 %329
    %v331 = vadd.f32 %v260, %v261
    %v332 = vadd.f32 %v331, %v262
    %v333 = vadd.f32 %v332, %v263
    %334 = vadd.xlane.f32.xlu0 %v333
    %v335 = vpop.xlane.xlu0 %334
    %v336 = vadd.f32 %v264, %v265
    %v337 = vadd.f32 %v336, %v266
    %v338 = vadd.f32 %v337, %v267
    %339 = vadd.xlane.f32.xlu0 %v338
    %v340 = vpop.xlane.xlu0 %339
    %v341 = vadd.f32 %v268, %v269
    %v342 = vadd.f32 %v341, %v270
    %v343 = vadd.f32 %v342, %v271
    %344 = vadd.xlane.f32.xlu0 %v343
    %v345 = vpop.xlane.xlu0 %344
    %v346 = vadd.f32 %v272, %v273
    %v347 = vadd.f32 %v346, %v274
    %v348 = vadd.f32 %v347, %v275
    %349 = vadd.xlane.f32.xlu0 %v348
    %v350 = vpop.xlane.xlu0 %349
    %v351 = vadd.f32 %v276, %v277
    %v352 = vadd.f32 %v351, %v278
    %v353 = vadd.f32 %v352, %v279
    %354 = vadd.xlane.f32.xlu0 %v353
    %v355 = vpop.xlane.xlu0 %354
    %v356 = vadd.f32 %v280, %v281
    %v357 = vadd.f32 %v356, %v282
    %v358 = vadd.f32 %v357, %v283
    %359 = vadd.xlane.f32.xlu0 %v358
    %v360 = vpop.xlane.xlu0 %359
    %v361 = vadd.f32 %v284, %v285
    %v362 = vadd.f32 %v361, %v286
    %v363 = vadd.f32 %v362, %v287
    %364 = vadd.xlane.f32.xlu0 %v363
    %v365 = vpop.xlane.xlu0 %364
    %v366 = vadd.f32 %v288, %v289
    %v367 = vadd.f32 %v366, %v290
    %v368 = vadd.f32 %v367, %v291
    %369 = vadd.xlane.f32.xlu0 %v368
    %v370 = vpop.xlane.xlu0 %369
    %v371 = vadd.f32 %v292, %v293
    %v372 = vadd.f32 %v371, %v294
    %v373 = vadd.f32 %v372, %v295
    %374 = vadd.xlane.f32.xlu0 %v373
    %v375 = vpop.xlane.xlu0 %374
    %vm376 = vcmp.eq.f32.partialorder %v300, 0.0
    %vm377 = vcmp.eq.f32.partialorder %v305, 0.0
    %vm378 = vcmp.eq.f32.partialorder %v310, 0.0
    %vm379 = vcmp.eq.f32.partialorder %v315, 0.0
    %vm380 = vcmp.eq.f32.partialorder %v320, 0.0
    %vm381 = vcmp.eq.f32.partialorder %v325, 0.0
    %vm382 = vcmp.eq.f32.partialorder %v330, 0.0
    %vm383 = vcmp.eq.f32.partialorder %v335, 0.0
    %vm384 = vcmp.eq.f32.partialorder %v340, 0.0
    %vm385 = vcmp.eq.f32.partialorder %v345, 0.0
    %vm386 = vcmp.eq.f32.partialorder %v350, 0.0
    %vm387 = vcmp.eq.f32.partialorder %v355, 0.0
    %vm388 = vcmp.eq.f32.partialorder %v360, 0.0
    %vm389 = vcmp.eq.f32.partialorder %v365, 0.0
    %vm390 = vcmp.eq.f32.partialorder %v370, 0.0
    %vm391 = vcmp.eq.f32.partialorder %v375, 0.0
    %v392 = vrcp.pop %v300
    %v393 = vmul.f32 1.0, %v392
    %v394 = vrcp.pop %v305
    %v395 = vmul.f32 1.0, %v394
    %v396 = vrcp.pop %v310
    %v397 = vmul.f32 1.0, %v396
    %v398 = vrcp.pop %v315
    %v399 = vmul.f32 1.0, %v398
    %v400 = vrcp.pop %v320
    %v401 = vmul.f32 1.0, %v400
    %v402 = vrcp.pop %v325
    %v403 = vmul.f32 1.0, %v402
    %v404 = vrcp.pop %v330
    %v405 = vmul.f32 1.0, %v404
    %v406 = vrcp.pop %v335
    %v407 = vmul.f32 1.0, %v406
    %v408 = vrcp.pop %v340
    %v409 = vmul.f32 1.0, %v408
    %v410 = vrcp.pop %v345
    %v411 = vmul.f32 1.0, %v410
    %v412 = vrcp.pop %v350
    %v413 = vmul.f32 1.0, %v412
    %v414 = vrcp.pop %v355
    %v415 = vmul.f32 1.0, %v414
    %v416 = vrcp.pop %v360
    %v417 = vmul.f32 1.0, %v416
    %v418 = vrcp.pop %v365
    %v419 = vmul.f32 1.0, %v418
    %v420 = vrcp.pop %v370
    %v421 = vmul.f32 1.0, %v420
    %v422 = vrcp.pop %v375
    %v423 = vmul.f32 1.0, %v422
    %v424 = vsel %vm376, 0.0, %v393
    %v425 = vsel %vm377, 0.0, %v395
    %v426 = vsel %vm378, 0.0, %v397
    %v427 = vsel %vm379, 0.0, %v399
    %v428 = vsel %vm380, 0.0, %v401
    %v429 = vsel %vm381, 0.0, %v403
    %v430 = vsel %vm382, 0.0, %v405
    %v431 = vsel %vm383, 0.0, %v407
    %v432 = vsel %vm384, 0.0, %v409
    %v433 = vsel %vm385, 0.0, %v411
    %v434 = vsel %vm386, 0.0, %v413
    %v435 = vsel %vm387, 0.0, %v415
    %v436 = vsel %vm388, 0.0, %v417
    %v437 = vsel %vm389, 0.0, %v419
    %v438 = vsel %vm390, 0.0, %v421
    %v439 = vsel %vm391, 0.0, %v423
    %v440 = vmul.f32 %v232, %v424
    %v441 = vmul.f32 %v233, %v424
    %v442 = vmul.f32 %v234, %v424
    %v443 = vmul.f32 %v235, %v424
    %v444 = vmul.f32 %v236, %v425
    %v445 = vmul.f32 %v237, %v425
    %v446 = vmul.f32 %v238, %v425
    %v447 = vmul.f32 %v239, %v425
    %v448 = vmul.f32 %v240, %v426
    %v449 = vmul.f32 %v241, %v426
    %v450 = vmul.f32 %v242, %v426
    %v451 = vmul.f32 %v243, %v426
    %v452 = vmul.f32 %v244, %v427
    %v453 = vmul.f32 %v245, %v427
    %v454 = vmul.f32 %v246, %v427
    %v455 = vmul.f32 %v247, %v427
    %v456 = vmul.f32 %v248, %v428
    %v457 = vmul.f32 %v249, %v428
    %v458 = vmul.f32 %v250, %v428
    %v459 = vmul.f32 %v251, %v428
    %v460 = vmul.f32 %v252, %v429
    %v461 = vmul.f32 %v253, %v429
    %v462 = vmul.f32 %v254, %v429
    %v463 = vmul.f32 %v255, %v429
    %v464 = vmul.f32 %v256, %v430
    %v465 = vmul.f32 %v257, %v430
    %v466 = vmul.f32 %v258, %v430
    %v467 = vmul.f32 %v259, %v430
    %v468 = vmul.f32 %v260, %v431
    %v469 = vmul.f32 %v261, %v431
    %v470 = vmul.f32 %v262, %v431
    %v471 = vmul.f32 %v263, %v431
    %v472 = vmul.f32 %v264, %v432
    %v473 = vmul.f32 %v265, %v432
    %v474 = vmul.f32 %v266, %v432
    %v475 = vmul.f32 %v267, %v432
    %v476 = vmul.f32 %v268, %v433
    %v477 = vmul.f32 %v269, %v433
    %v478 = vmul.f32 %v270, %v433
    %v479 = vmul.f32 %v271, %v433
    %v480 = vmul.f32 %v272, %v434
    %v481 = vmul.f32 %v273, %v434
    %v482 = vmul.f32 %v274, %v434
    %v483 = vmul.f32 %v275, %v434
    %v484 = vmul.f32 %v276, %v435
    %v485 = vmul.f32 %v277, %v435
    %v486 = vmul.f32 %v278, %v435
    %v487 = vmul.f32 %v279, %v435
    %v488 = vmul.f32 %v280, %v436
    %v489 = vmul.f32 %v281, %v436
    %v490 = vmul.f32 %v282, %v436
    %v491 = vmul.f32 %v283, %v436
    %v492 = vmul.f32 %v284, %v437
    %v493 = vmul.f32 %v285, %v437
    %v494 = vmul.f32 %v286, %v437
    %v495 = vmul.f32 %v287, %v437
    %v496 = vmul.f32 %v288, %v438
    %v497 = vmul.f32 %v289, %v438
    %v498 = vmul.f32 %v290, %v438
    %v499 = vmul.f32 %v291, %v438
    %v500 = vmul.f32 %v292, %v439
    %v501 = vmul.f32 %v293, %v439
    %v502 = vmul.f32 %v294, %v439
    %v503 = vmul.f32 %v295, %v439
    %504 = vst [vmem:[#allocation7] sm:$0xff] %v440
    %505 = vst [vmem:[#allocation7 + $0x8] sm:$0xff] %v441
    %506 = vst [vmem:[#allocation7 + $0x10] sm:$0xff] %v442
    %507 = vst [vmem:[#allocation7 + $0x18] sm:$0xff] %v443
    %508 = vst [vmem:[#allocation7 + $0x20] sm:$0xff] %v444
    %509 = vst [vmem:[#allocation7 + $0x28] sm:$0xff] %v445
    %510 = vst [vmem:[#allocation7 + $0x30] sm:$0xff] %v446
    %511 = vst [vmem:[#allocation7 + $0x38] sm:$0xff] %v447
    %512 = vst [vmem:[#allocation7 + $0x40] sm:$0xff] %v448
    %513 = vst [vmem:[#allocation7 + $0x48] sm:$0xff] %v449
    %514 = vst [vmem:[#allocation7 + $0x50] sm:$0xff] %v450
    %515 = vst [vmem:[#allocation7 + $0x58] sm:$0xff] %v451
    %516 = vst [vmem:[#allocation7 + $0x60] sm:$0xff] %v452
    %517 = vst [vmem:[#allocation7 + $0x68] sm:$0xff] %v453
    %518 = vst [vmem:[#allocation7 + $0x70] sm:$0xff] %v454
    %519 = vst [vmem:[#allocation7 + $0x78] sm:$0xff] %v455
    %520 = vst [vmem:[#allocation7 + $0x80] sm:$0xff] %v456
    %521 = vst [vmem:[#allocation7 + $0x88] sm:$0xff] %v457
    %522 = vst [vmem:[#allocation7 + $0x90] sm:$0xff] %v458
    %523 = vst [vmem:[#allocation7 + $0x98] sm:$0xff] %v459
    %524 = vst [vmem:[#allocation7 + $0xa0] sm:$0xff] %v460
    %525 = vst [vmem:[#allocation7 + $0xa8] sm:$0xff] %v461
    %526 = vst [vmem:[#allocation7 + $0xb0] sm:$0xff] %v462
    %527 = vst [vmem:[#allocation7 + $0xb8] sm:$0xff] %v463
    %528 = vst [vmem:[#allocation7 + $0xc0] sm:$0xff] %v464
    %529 = vst [vmem:[#allocation7 + $0xc8] sm:$0xff] %v465
    %530 = vst [vmem:[#allocation7 + $0xd0] sm:$0xff] %v466
    %531 = vst [vmem:[#allocation7 + $0xd8] sm:$0xff] %v467
    %532 = vst [vmem:[#allocation7 + $0xe0] sm:$0xff] %v468
    %533 = vst [vmem:[#allocation7 + $0xe8] sm:$0xff] %v469
    %534 = vst [vmem:[#allocation7 + $0xf0] sm:$0xff] %v470
    %535 = vst [vmem:[#allocation7 + $0xf8] sm:$0xff] %v471
    %536 = vst [vmem:[#allocation7 + $0x100] sm:$0xff] %v472
    %537 = vst [vmem:[#allocation7 + $0x108] sm:$0xff] %v473
    %538 = vst [vmem:[#allocation7 + $0x110] sm:$0xff] %v474
    %539 = vst [vmem:[#allocation7 + $0x118] sm:$0xff] %v475
    %540 = vst [vmem:[#allocation7 + $0x120] sm:$0xff] %v476
    %541 = vst [vmem:[#allocation7 + $0x128] sm:$0xff] %v477
    %542 = vst [vmem:[#allocation7 + $0x130] sm:$0xff] %v478
    %543 = vst [vmem:[#allocation7 + $0x138] sm:$0xff] %v479
    %544 = vst [vmem:[#allocation7 + $0x140] sm:$0xff] %v480
    %545 = vst [vmem:[#allocation7 + $0x148] sm:$0xff] %v481
    %546 = vst [vmem:[#allocation7 + $0x150] sm:$0xff] %v482
    %547 = vst [vmem:[#allocation7 + $0x158] sm:$0xff] %v483
    %548 = vst [vmem:[#allocation7 + $0x160] sm:$0xff] %v484
    %549 = vst [vmem:[#allocation7 + $0x168] sm:$0xff] %v485
    %550 = vst [vmem:[#allocation7 + $0x170] sm:$0xff] %v486
    %551 = vst [vmem:[#allocation7 + $0x178] sm:$0xff] %v487
    %552 = vst [vmem:[#allocation7 + $0x180] sm:$0xff] %v488
    %553 = vst [vmem:[#allocation7 + $0x188] sm:$0xff] %v489
    %554 = vst [vmem:[#allocation7 + $0x190] sm:$0xff] %v490
    %555 = vst [vmem:[#allocation7 + $0x198] sm:$0xff] %v491
    %556 = vst [vmem:[#allocation7 + $0x1a0] sm:$0xff] %v492
    %557 = vst [vmem:[#allocation7 + $0x1a8] sm:$0xff] %v493
    %558 = vst [vmem:[#allocation7 + $0x1b0] sm:$0xff] %v494
    %559 = vst [vmem:[#allocation7 + $0x1b8] sm:$0xff] %v495
    %560 = vst [vmem:[#allocation7 + $0x1c0] sm:$0xff] %v496
    %561 = vst [vmem:[#allocation7 + $0x1c8] sm:$0xff] %v497
    %562 = vst [vmem:[#allocation7 + $0x1d0] sm:$0xff] %v498
    %563 = vst [vmem:[#allocation7 + $0x1d8] sm:$0xff] %v499
    %564 = vst [vmem:[#allocation7 + $0x1e0] sm:$0xff] %v500
    %565 = vst [vmem:[#allocation7 + $0x1e8] sm:$0xff] %v501
    %566 = vst [vmem:[#allocation7 + $0x1f0] sm:$0xff] %v502
    %567 = vst [vmem:[#allocation7 + $0x1f8] sm:$0xff] %v503
    // Predicated region
    $region18: #{tpu_custom_call.1} parent=1 // pred_check
      _
    $region19: #{tpu_custom_call.1} parent=1 // pred_check_branch
      %569 = sbr.rel (0) target = $region21
    $region20: #{tpu_custom_call.1} parent=1 // pred_region
      %s571 = ssub.s32 8192, 8192
      %572 = vsyncadd [#allocation4], %s571
      %s573 = sshll.u32 [#allocation7], 4
      %s574 = int_to_ptr.vmem [resolvable:$true] %s573
      %579 = dma.vmem_to_hbm [thread:$0]  %s574, 8192, %s2, [#allocation4], 512, 512, 32
    $region21: #{tpu_custom_call.1} parent=1 // pred_fallthru
      _
    // Predicated region
    $region22: #{tpu_custom_call.1} parent=1 // pred_check
      _
    $region23: #{tpu_custom_call.1} parent=1 // pred_check_branch
      %581 = sbr.rel (0) target = $region25
    $region24: #{tpu_custom_call.1} parent=1 // pred_region
      %582 = dma.done [#allocation4], 8192
    $region25: #{tpu_custom_call.1} parent=1 // pred_fallthru
      _
    %583 = vsyncpa [#allocation3], 1
    %584 = vsyncpa [#allocation6], 1
    %585 = vsyncpa [#allocation4], 1

</llo_original>
